<compile_context>
chip_gen: v5e
topology: v5e:2x2
jax: 0.10.0
libtpu: 0.0.40
codegen_flags: <defaults>
</compile_context>

<pallas_src>
import functools

import jax
import jax.numpy as jnp
from jax.experimental import pallas as pl
from jax.experimental.pallas import tpu as pltpu

IN_DIM = 32        # Mona in_dim
HID = 64           # fixed hidden width (project1 -> 64 -> MonaOp(64) -> project2)
LN_EPS = 1e-5      # nn.LayerNorm default eps
NRM_EPS = 1e-12    # F.normalize default eps
_SQRT_HALF = 0.7071067811865476


def _cdiv(a, b):
    return (a + b - 1) // b


def _round_up(a, b):
    return _cdiv(a, b) * b


def _erf_as(z):
    """Abramowitz & Stegun 7.1.26 erf, |err| <= 1.5e-7.

    Uses only exp (EUP) + a short polynomial, so the exact-GELU path never
    depends on a Mosaic lowering for lax.erf."""
    a1, a2, a3, a4, a5 = (0.254829592, -0.284496736, 1.421413741,
                          -1.453152027, 1.061405429)
    p = 0.3275911
    az = jnp.abs(z)
    t = 1.0 / (1.0 + p * az)
    poly = ((((a5 * t + a4) * t + a3) * t + a2) * t + a1) * t
    y = 1.0 - poly * jnp.exp(-az * az)
    return jnp.where(z < 0.0, -y, y)


def _gelu(v, approx):
    if approx:
        return jax.nn.gelu(v, approximate=True)        # tanh -> EUP slot
    return 0.5 * v * (1.0 + _erf_as(v * _SQRT_HALF))   # "exact" (err ~1e-7)


def _mona_kernel(x_ref, vec32_ref, w1x_ref, b1x_ref, wtd_ref, bp_ref, w2t_ref,
                 o_ref, *, approx_gelu):
    """One token tile of the full Mona forward.

    Input/output tiles are token-major (TM, IN_DIM); all compute runs in the
    vreg-dense channels-on-sublanes layout obtained by one in-kernel XLU
    transpose per direction."""
    x_tm = x_ref[...]                                  # (TM, D) token-major
    x = x_tm.T                                         # (D, TM) channel-major

    vec = vec32_ref[...]                               # (D, 4)
    a = vec[:, 0:1]          # ln_w * gamma
    b = vec[:, 1:2]          # ln_b * gamma
    gx = vec[:, 2:3]         # gammax
    b2 = vec[:, 3:4]         # project2 bias

    # --- x = LayerNorm(x)*gamma + x*gammax   (reduce over channel sublanes) --
    mu = jnp.mean(x, axis=0, keepdims=True)            # (1, TM)
    xc = x - mu
    var = jnp.mean(xc * xc, axis=0, keepdims=True)
    xhat = xc * jax.lax.rsqrt(var + LN_EPS)
    xs = xhat * a + b + x * gx                         # (D, TM)

    # --- project1 (+ folded prompt dot): rows [0:64] = p1, row 64 = <prn, p1> -
    p1x = jnp.dot(w1x_ref[...], xs,
                  preferred_element_type=jnp.float32) + b1x_ref[...]  # (72, TM)
    p1 = p1x[:HID, :]                                  # (HID, TM)
    dot = p1x[HID:HID + 1, :]                          # (1, TM)

    # --- MonaOp cosine select: cos = <p1_hat, prompt_hat>, mask = clamp(0,1) --
    sumsq = jnp.sum(p1 * p1, axis=0, keepdims=True)    # (1, TM)
    cos = dot * jax.lax.rsqrt(jnp.maximum(sumsq, NRM_EPS * NRM_EPS))
    mask = jnp.clip(cos, 0.0, 1.0)

    # --- fused (top_down_transform @ 1x1-conv projector) + MonaOp residual ----
    t = jnp.dot(wtd_ref[...], p1 * mask,
                preferred_element_type=jnp.float32) + bp_ref[...]     # (HID, TM)
    p1o = p1 + t

    # --- gelu (tanh/EUP by default; exact erf path available) -----------------
    # TODO(synk): dropout(p=0.1) omitted (eval mode / identity).
    nl = _gelu(p1o, approx_gelu)

    # --- project2 + outer residual, back to token-major for a full-row store --
    p2 = jnp.dot(w2t_ref[...], nl,
                 preferred_element_type=jnp.float32)                  # (D, TM)
    o = x + p2 + b2
    o_ref[...] = o.T                                   # (TM, D)


def init_params(key, in_dim=IN_DIM, hid=HID):
    ks = jax.random.split(key, 7)
    return {
        # nn.LayerNorm(in_dim)
        "ln_w": jnp.ones((in_dim,), jnp.float32),
        "ln_b": jnp.zeros((in_dim,), jnp.float32),
        # gamma / gammax
        "gamma": jnp.full((in_dim,), 1e-6, jnp.float32),
        "gammax": jnp.ones((in_dim,), jnp.float32),
        # project1: Linear(in_dim, 64)  (stored in x @ W orientation)
        "w1": (jax.random.normal(ks[0], (in_dim, hid)) * 0.05).astype(jnp.float32),
        "b1": (jax.random.normal(ks[1], (hid,)) * 0.05).astype(jnp.float32),
        # MonaOp(64): prompt (64,), top_down_transform = eye(64),
        # projector = Conv2d(64, 64, 1) -> weight (64,64) (x @ W orient.), bias
        "prompt": jax.random.normal(ks[2], (hid,)).astype(jnp.float32),
        "tdt": jnp.eye(hid, dtype=jnp.float32),
        "wp": (jax.random.normal(ks[3], (hid, hid)) * 0.05).astype(jnp.float32),
        "bp": (jax.random.normal(ks[4], (hid,)) * 0.05).astype(jnp.float32),
        # project2: Linear(64, in_dim)
        "w2": (jax.random.normal(ks[5], (hid, in_dim)) * 0.05).astype(jnp.float32),
        "b2": (jax.random.normal(ks[6], (in_dim,)) * 0.05).astype(jnp.float32),
    }


def _prep_params(params):
    """Kernel-friendly parameters: folded, fused, transposed, packed."""
    in_dim = params["ln_w"].shape[0]
    hid = params["b1"].shape[0]

    # Fold gamma into the LN affine; pack all (in_dim,) vectors into one array.
    a = params["ln_w"] * params["gamma"]
    b = params["ln_b"] * params["gamma"]
    vec32 = jnp.stack([a, b, params["gammax"], params["b2"]], axis=1)   # (D, 4)

    # project1 with the normalized-prompt dot folded in as an extra row.
    w1t = params["w1"].T                                                # (HID, D)
    prn = params["prompt"] / jnp.maximum(
        jnp.linalg.norm(params["prompt"]), NRM_EPS)                     # (HID,)
    r = prn @ w1t                                                       # (D,)
    c = jnp.dot(prn, params["b1"])                                      # scalar
    pad = (-(hid + 1)) % 8                                              # -> 72 rows
    w1x = jnp.concatenate(
        [w1t, r[None, :], jnp.zeros((pad, in_dim), jnp.float32)], axis=0)
    b1x = jnp.concatenate(
        [params["b1"], c[None], jnp.zeros((pad,), jnp.float32)])[:, None]

    return {
        "vec32": vec32,                                                 # (D, 4)
        "w1x": w1x,                                                     # (72, D)
        "b1x": b1x,                                                     # (72, 1)
        "wtd_t": (params["tdt"] @ params["wp"]).T,                      # (HID, HID)
        "bp": params["bp"][:, None],                                    # (HID, 1)
        "w2t": params["w2"].T,                                          # (D, HID)
    }


@functools.partial(jax.jit, static_argnames=("hw_shapes", "tm", "approx_gelu"))
def mona_forward(x, params, hw_shapes=None, tm=8192, approx_gelu=True):
    """x: (B, N, in_dim) tokens; hw_shapes=(H, W) with N == H*W (unused: all
    ops are per-token since the MonaOp projector is a 1x1 conv)."""
    del hw_shapes
    B, N, D = x.shape
    M = B * N

    prep = _prep_params(params)
    x2d = x.reshape(M, D)      # contiguous reshape: no extra HBM pass

    # Token tile: <= tm, multiple of 128, and small enough to give >= 2 grid
    # steps whenever M allows (v7x megacore / DMA-compute overlap).
    tm_eff = min(_round_up(tm, 128), max(128, _round_up(_cdiv(M, 2), 128)))
    grid = _cdiv(M, tm_eff)

    # VMEM budget derived from the tile footprint (double-buffered token-major
    # in/out blocks + channel-major intermediates), clamped under v7x's 64 MiB.
    vmem_bytes = tm_eff * 4 * (4 * D + 14 * HID) + (4 << 20)
    vmem_bytes = int(min(max(vmem_bytes, 16 << 20), 56 << 20))

    kernel = functools.partial(_mona_kernel, approx_gelu=approx_gelu)

    param_order = ("vec32", "w1x", "b1x", "wtd_t", "bp", "w2t")
    param_args = [prep[k] for k in param_order]
    param_specs = [pl.BlockSpec(p.shape, lambda i: (0, 0)) for p in param_args]

    out = pl.pallas_call(
        kernel,
        out_shape=jax.ShapeDtypeStruct((M, D), jnp.float32),
        grid_spec=pltpu.PrefetchScalarGridSpec(
            num_scalar_prefetch=0,
            grid=(grid,),
            in_specs=[pl.BlockSpec((tm_eff, D), lambda i: (i, 0))] + param_specs,
            out_specs=pl.BlockSpec((tm_eff, D), lambda i: (i, 0)),
        ),
        compiler_params=pltpu.CompilerParams(
            dimension_semantics=("parallel",),
            vmem_limit_bytes=vmem_bytes),
    )(x2d, *param_args)

    return out.reshape(B, N, D)


def mona_reference(x, params, approx_gelu=True):
    """Pure-JAX reference of the same (intended) forward semantics."""
    B, N, D = x.shape
    xs = x.reshape(-1, D)
    mu = jnp.mean(xs, axis=-1, keepdims=True)
    var = jnp.mean((xs - mu) ** 2, axis=-1, keepdims=True)
    ln = (xs - mu) / jnp.sqrt(var + LN_EPS) * params["ln_w"] + params["ln_b"]
    h = ln * params["gamma"] + xs * params["gammax"]
    p1 = h @ params["w1"] + params["b1"]
    pr_n = params["prompt"] / jnp.maximum(jnp.linalg.norm(params["prompt"]), NRM_EPS)
    t_n = p1 / jnp.maximum(jnp.linalg.norm(p1, axis=-1, keepdims=True), NRM_EPS)
    mask = jnp.clip(t_n @ pr_n[:, None], 0.0, 1.0)
    t = (p1 * mask) @ params["tdt"]
    t = t @ params["wp"] + params["bp"]
    p1o = p1 + t
    nl = jax.nn.gelu(p1o, approximate=approx_gelu)
    p2 = nl @ params["w2"] + params["b2"]
    return (xs + p2).reshape(B, N, D)


if __name__ == "__main__":
    key = jax.random.PRNGKey(0)
    kx, kx2, kp = jax.random.split(key, 3)
    params = init_params(kp)

    # Case 1: B=2, H=8, W=8 -> 128 tokens; exact-GELU path, tight tolerance.
    B, H, W = 2, 8, 8
    N = H * W
    x = jax.random.normal(kx, (B, N, IN_DIM), dtype=jnp.float32)
    out = jax.block_until_ready(
        mona_forward(x, params, hw_shapes=(H, W), approx_gelu=False))
    ref = mona_reference(x, params, approx_gelu=False)
    assert out.shape == (B, N, IN_DIM)
    err = float(jnp.max(jnp.abs(out - ref)))
    assert jnp.allclose(out, ref, rtol=1e-3, atol=1e-3), err

    # Case 2: ragged token count (M=300, not a multiple of the tile) exercises
    # the partial last block and the default tanh-GELU fast path.
    B2, H2, W2 = 3, 10, 10
    N2 = H2 * W2
    x2 = jax.random.normal(kx2, (B2, N2, IN_DIM), dtype=jnp.float32)
    out2 = jax.block_until_ready(mona_forward(x2, params, hw_shapes=(H2, W2)))
    ref2 = mona_reference(x2, params, approx_gelu=True)
    assert out2.shape == (B2, N2, IN_DIM)
    err2 = float(jnp.max(jnp.abs(out2 - ref2)))
    assert jnp.allclose(out2, ref2, rtol=1e-3, atol=1e-3), err2

    print("KERNEL_OK")
</pallas_src>

<mosaic_0001>
module attributes {stable_mosaic.version = 11 : i64} {
  func.func @_mona_kernel(%arg0: i32, %arg1: memref<128x32xf32, #tpu.memory_space<vmem>>, %arg2: memref<32x4xf32, #tpu.memory_space<vmem>>, %arg3: memref<72x32xf32, #tpu.memory_space<vmem>>, %arg4: memref<72x1xf32, #tpu.memory_space<vmem>>, %arg5: memref<64x64xf32, #tpu.memory_space<vmem>>, %arg6: memref<64x1xf32, #tpu.memory_space<vmem>>, %arg7: memref<32x64xf32, #tpu.memory_space<vmem>>, %arg8: memref<128x32xf32, #tpu.memory_space<vmem>>) attributes {dimension_semantics = [#tpu.dimension_semantics<parallel>], iteration_bounds = array<i64: 1>, scalar_prefetch = 0 : i64, scratch_operands = 0 : i64, tpu.core_type = #tpu.core_type<tc>, window_params = [{transform_indices = @transform_0, window_bounds = array<i64: 128, 32>}, {pipeline_mode = #tpu.pipeline_mode<synchronous>, transform_indices = @transform_1, window_bounds = array<i64: 32, 4>}, {pipeline_mode = #tpu.pipeline_mode<synchronous>, transform_indices = @transform_2, window_bounds = array<i64: 72, 32>}, {pipeline_mode = #tpu.pipeline_mode<synchronous>, transform_indices = @transform_3, window_bounds = array<i64: 72, 1>}, {pipeline_mode = #tpu.pipeline_mode<synchronous>, transform_indices = @transform_4, window_bounds = array<i64: 64, 64>}, {pipeline_mode = #tpu.pipeline_mode<synchronous>, transform_indices = @transform_5, window_bounds = array<i64: 64, 1>}, {pipeline_mode = #tpu.pipeline_mode<synchronous>, transform_indices = @transform_6, window_bounds = array<i64: 32, 64>}, {transform_indices = @transform_7, window_bounds = array<i64: 128, 32>}]} {
    %c0 = arith.constant 0 : index
    %c0_0 = arith.constant 0 : index
    %0 = vector.load %arg1[%c0, %c0_0] : memref<128x32xf32, #tpu.memory_space<vmem>>, vector<128x32xf32>
    %1 = tpu.transpose %0, [1, 0] : vector<128x32xf32> -> vector<32x128xf32>
    %c0_1 = arith.constant 0 : index
    %c0_2 = arith.constant 0 : index
    %2 = vector.load %arg2[%c0_1, %c0_2] : memref<32x4xf32, #tpu.memory_space<vmem>>, vector<32x4xf32>
    %3 = vector.extract_strided_slice %2 {offsets = [0, 0], sizes = [32, 1], strides = [1, 1]} : vector<32x4xf32> to vector<32x1xf32>
    %4 = vector.extract_strided_slice %2 {offsets = [0, 1], sizes = [32, 1], strides = [1, 1]} : vector<32x4xf32> to vector<32x1xf32>
    %5 = vector.extract_strided_slice %2 {offsets = [0, 2], sizes = [32, 1], strides = [1, 1]} : vector<32x4xf32> to vector<32x1xf32>
    %6 = vector.extract_strided_slice %2 {offsets = [0, 3], sizes = [32, 1], strides = [1, 1]} : vector<32x4xf32> to vector<32x1xf32>
    %cst = arith.constant dense<0.000000e+00> : vector<128xf32>
    %7 = vector.multi_reduction <add>, %1, %cst [0] : vector<32x128xf32> to vector<128xf32>
    %8 = vector.shape_cast %7 : vector<128xf32> to vector<1x128xf32>
    %cst_3 = arith.constant 3.200000e+01 : f32
    %9 = vector.broadcast %cst_3 : f32 to vector<1x128xf32>
    %10 = arith.divf %8, %9 : vector<1x128xf32>
    %11 = vector.broadcast %10 : vector<1x128xf32> to vector<32x128xf32>
    %12 = arith.subf %1, %11 : vector<32x128xf32>
    %13 = arith.mulf %12, %12 : vector<32x128xf32>
    %cst_4 = arith.constant dense<0.000000e+00> : vector<128xf32>
    %14 = vector.multi_reduction <add>, %13, %cst_4 [0] : vector<32x128xf32> to vector<128xf32>
    %15 = vector.shape_cast %14 : vector<128xf32> to vector<1x128xf32>
    %cst_5 = arith.constant 3.200000e+01 : f32
    %16 = vector.broadcast %cst_5 : f32 to vector<1x128xf32>
    %17 = arith.divf %15, %16 : vector<1x128xf32>
    %cst_6 = arith.constant 9.99999974E-6 : f32
    %18 = vector.broadcast %cst_6 : f32 to vector<1x128xf32>
    %19 = arith.addf %17, %18 : vector<1x128xf32>
    %20 = math.rsqrt %19 : vector<1x128xf32>
    %21 = vector.broadcast %20 : vector<1x128xf32> to vector<32x128xf32>
    %22 = arith.mulf %12, %21 : vector<32x128xf32>
    %23 = vector.broadcast %3 : vector<32x1xf32> to vector<32x128xf32>
    %24 = arith.mulf %22, %23 : vector<32x128xf32>
    %25 = vector.broadcast %4 : vector<32x1xf32> to vector<32x128xf32>
    %26 = arith.addf %24, %25 : vector<32x128xf32>
    %27 = vector.broadcast %5 : vector<32x1xf32> to vector<32x128xf32>
    %28 = arith.mulf %1, %27 : vector<32x128xf32>
    %29 = arith.addf %26, %28 : vector<32x128xf32>
    %c0_7 = arith.constant 0 : index
    %c0_8 = arith.constant 0 : index
    %30 = vector.load %arg3[%c0_7, %c0_8] : memref<72x32xf32, #tpu.memory_space<vmem>>, vector<72x32xf32>
    %cst_9 = arith.constant dense<0.000000e+00> : vector<72x128xf32>
    %31 = tpu.matmul %30, %29, %cst_9 {dimension_numbers = #tpu.dot_dimension_numbers<[1], [0], [0], [1], [0, 0, 1, 1], [], []>} : vector<72x32xf32>, vector<32x128xf32>, vector<72x128xf32> -> vector<72x128xf32>
    %c0_10 = arith.constant 0 : index
    %c0_11 = arith.constant 0 : index
    %32 = vector.load %arg4[%c0_10, %c0_11] : memref<72x1xf32, #tpu.memory_space<vmem>>, vector<72x1xf32>
    %33 = vector.broadcast %32 : vector<72x1xf32> to vector<72x128xf32>
    %34 = arith.addf %31, %33 : vector<72x128xf32>
    %35 = vector.extract_strided_slice %34 {offsets = [0, 0], sizes = [64, 128], strides = [1, 1]} : vector<72x128xf32> to vector<64x128xf32>
    %36 = vector.extract_strided_slice %34 {offsets = [64, 0], sizes = [1, 128], strides = [1, 1]} : vector<72x128xf32> to vector<1x128xf32>
    %37 = arith.mulf %35, %35 : vector<64x128xf32>
    %cst_12 = arith.constant dense<0.000000e+00> : vector<128xf32>
    %38 = vector.multi_reduction <add>, %37, %cst_12 [0] : vector<64x128xf32> to vector<128xf32>
    %39 = vector.shape_cast %38 : vector<128xf32> to vector<1x128xf32>
    %cst_13 = arith.constant 1.000000e-24 : f32
    %40 = vector.broadcast %cst_13 : f32 to vector<1x128xf32>
    %41 = arith.maximumf %39, %40 : vector<1x128xf32>
    %42 = math.rsqrt %41 : vector<1x128xf32>
    %43 = arith.mulf %36, %42 : vector<1x128xf32>
    %cst_14 = arith.constant 0.000000e+00 : f32
    %cst_15 = arith.constant 1.000000e+00 : f32
    %44 = vector.broadcast %cst_14 : f32 to vector<1x128xf32>
    %45 = arith.maximumf %44, %43 : vector<1x128xf32>
    %46 = vector.broadcast %cst_15 : f32 to vector<1x128xf32>
    %47 = arith.minimumf %46, %45 : vector<1x128xf32>
    %c0_16 = arith.constant 0 : index
    %c0_17 = arith.constant 0 : index
    %48 = vector.load %arg5[%c0_16, %c0_17] : memref<64x64xf32, #tpu.memory_space<vmem>>, vector<64x64xf32>
    %49 = vector.broadcast %47 : vector<1x128xf32> to vector<64x128xf32>
    %50 = arith.mulf %35, %49 : vector<64x128xf32>
    %cst_18 = arith.constant dense<0.000000e+00> : vector<64x128xf32>
    %51 = tpu.matmul %48, %50, %cst_18 {dimension_numbers = #tpu.dot_dimension_numbers<[1], [0], [0], [1], [0, 0, 1, 1], [], []>} : vector<64x64xf32>, vector<64x128xf32>, vector<64x128xf32> -> vector<64x128xf32>
    %c0_19 = arith.constant 0 : index
    %c0_20 = arith.constant 0 : index
    %52 = vector.load %arg6[%c0_19, %c0_20] : memref<64x1xf32, #tpu.memory_space<vmem>>, vector<64x1xf32>
    %53 = vector.broadcast %52 : vector<64x1xf32> to vector<64x128xf32>
    %54 = arith.addf %51, %53 : vector<64x128xf32>
    %55 = arith.addf %35, %54 : vector<64x128xf32>
    %cst_21 = arith.constant 5.000000e-01 : f32
    %56 = vector.broadcast %cst_21 : f32 to vector<64x128xf32>
    %57 = arith.mulf %56, %55 : vector<64x128xf32>
    %cst_22 = arith.constant 0.707106769 : f32
    %58 = vector.broadcast %cst_22 : f32 to vector<64x128xf32>
    %59 = arith.mulf %55, %58 : vector<64x128xf32>
    %60 = math.absf %59 : vector<64x128xf32>
    %cst_23 = arith.constant 0.327591091 : f32
    %61 = vector.broadcast %cst_23 : f32 to vector<64x128xf32>
    %62 = arith.mulf %61, %60 : vector<64x128xf32>
    %cst_24 = arith.constant 1.000000e+00 : f32
    %63 = vector.broadcast %cst_24 : f32 to vector<64x128xf32>
    %64 = arith.addf %63, %62 : vector<64x128xf32>
    %cst_25 = arith.constant 1.000000e+00 : f32
    %65 = vector.broadcast %cst_25 : f32 to vector<64x128xf32>
    %66 = arith.divf %65, %64 : vector<64x128xf32>
    %cst_26 = arith.constant 1.06140542 : f32
    %67 = vector.broadcast %cst_26 : f32 to vector<64x128xf32>
    %68 = arith.mulf %67, %66 : vector<64x128xf32>
    %cst_27 = arith.constant -1.45315206 : f32
    %69 = vector.broadcast %cst_27 : f32 to vector<64x128xf32>
    %70 = arith.addf %68, %69 : vector<64x128xf32>
    %71 = arith.mulf %70, %66 : vector<64x128xf32>
    %cst_28 = arith.constant 1.42141378 : f32
    %72 = vector.broadcast %cst_28 : f32 to vector<64x128xf32>
    %73 = arith.addf %71, %72 : vector<64x128xf32>
    %74 = arith.mulf %73, %66 : vector<64x128xf32>
    %cst_29 = arith.constant -0.284496725 : f32
    %75 = vector.broadcast %cst_29 : f32 to vector<64x128xf32>
    %76 = arith.addf %74, %75 : vector<64x128xf32>
    %77 = arith.mulf %76, %66 : vector<64x128xf32>
    %cst_30 = arith.constant 0.254829586 : f32
    %78 = vector.broadcast %cst_30 : f32 to vector<64x128xf32>
    %79 = arith.addf %77, %78 : vector<64x128xf32>
    %80 = arith.mulf %79, %66 : vector<64x128xf32>
    %cst_31 = arith.constant 0.000000e+00 : f32
    %81 = vector.broadcast %cst_31 : f32 to vector<64x128xf32>
    %82 = arith.subf %81, %60 : vector<64x128xf32>
    %83 = arith.mulf %82, %60 : vector<64x128xf32>
    %84 = math.exp %83 : vector<64x128xf32>
    %85 = arith.mulf %80, %84 : vector<64x128xf32>
    %cst_32 = arith.constant 1.000000e+00 : f32
    %86 = vector.broadcast %cst_32 : f32 to vector<64x128xf32>
    %87 = arith.subf %86, %85 : vector<64x128xf32>
    %cst_33 = arith.constant 0.000000e+00 : f32
    %88 = vector.broadcast %cst_33 : f32 to vector<64x128xf32>
    %89 = arith.cmpf olt, %59, %88 : vector<64x128xf32>
    %cst_34 = arith.constant 0.000000e+00 : f32
    %90 = vector.broadcast %cst_34 : f32 to vector<64x128xf32>
    %91 = arith.subf %90, %87 : vector<64x128xf32>
    %92 = arith.select %89, %91, %87 : vector<64x128xi1>, vector<64x128xf32>
    %cst_35 = arith.constant 1.000000e+00 : f32
    %93 = vector.broadcast %cst_35 : f32 to vector<64x128xf32>
    %94 = arith.addf %93, %92 : vector<64x128xf32>
    %95 = arith.mulf %57, %94 : vector<64x128xf32>
    %c0_36 = arith.constant 0 : index
    %c0_37 = arith.constant 0 : index
    %96 = vector.load %arg7[%c0_36, %c0_37] : memref<32x64xf32, #tpu.memory_space<vmem>>, vector<32x64xf32>
    %cst_38 = arith.constant dense<0.000000e+00> : vector<32x128xf32>
    %97 = tpu.matmul %96, %95, %cst_38 {dimension_numbers = #tpu.dot_dimension_numbers<[1], [0], [0], [1], [0, 0, 1, 1], [], []>} : vector<32x64xf32>, vector<64x128xf32>, vector<32x128xf32> -> vector<32x128xf32>
    %98 = arith.addf %1, %97 : vector<32x128xf32>
    %99 = vector.broadcast %6 : vector<32x1xf32> to vector<32x128xf32>
    %100 = arith.addf %98, %99 : vector<32x128xf32>
    %101 = tpu.transpose %100, [1, 0] : vector<32x128xf32> -> vector<128x32xf32>
    %c0_39 = arith.constant 0 : index
    %c0_40 = arith.constant 0 : index
    %102 = vector.load %arg8[%c0_39, %c0_40] : memref<128x32xf32, #tpu.memory_space<vmem>>, vector<128x32xf32>
    tpu.vector_store %arg8[%c0_39, %c0_40], %101 {strides = array<i32>} : memref<128x32xf32, #tpu.memory_space<vmem>>, vector<128x32xf32>,
    return
  }
  func.func @transform_0(%arg0: i32) -> (i32, i32) {
    %c0_i32 = arith.constant 0 : i32
    %c0_i32_0 = arith.constant 0 : i32
    return %arg0, %c0_i32 : i32, i32
  }
  func.func @transform_1(%arg0: i32) -> (i32, i32) {
    %c0_i32 = arith.constant 0 : i32
    %c0_i32_0 = arith.constant 0 : i32
    %c0_i32_1 = arith.constant 0 : i32
    return %c0_i32, %c0_i32_0 : i32, i32
  }
  func.func @transform_2(%arg0: i32) -> (i32, i32) {
    %c0_i32 = arith.constant 0 : i32
    %c0_i32_0 = arith.constant 0 : i32
    %c0_i32_1 = arith.constant 0 : i32
    return %c0_i32, %c0_i32_0 : i32, i32
  }
  func.func @transform_3(%arg0: i32) -> (i32, i32) {
    %c0_i32 = arith.constant 0 : i32
    %c0_i32_0 = arith.constant 0 : i32
    %c0_i32_1 = arith.constant 0 : i32
    return %c0_i32, %c0_i32_0 : i32, i32
  }
  func.func @transform_4(%arg0: i32) -> (i32, i32) {
    %c0_i32 = arith.constant 0 : i32
    %c0_i32_0 = arith.constant 0 : i32
    %c0_i32_1 = arith.constant 0 : i32
    return %c0_i32, %c0_i32_0 : i32, i32
  }
  func.func @transform_5(%arg0: i32) -> (i32, i32) {
    %c0_i32 = arith.constant 0 : i32
    %c0_i32_0 = arith.constant 0 : i32
    %c0_i32_1 = arith.constant 0 : i32
    return %c0_i32, %c0_i32_0 : i32, i32
  }
  func.func @transform_6(%arg0: i32) -> (i32, i32) {
    %c0_i32 = arith.constant 0 : i32
    %c0_i32_0 = arith.constant 0 : i32
    %c0_i32_1 = arith.constant 0 : i32
    return %c0_i32, %c0_i32_0 : i32, i32
  }
  func.func @transform_7(%arg0: i32) -> (i32, i32) {
    %c0_i32 = arith.constant 0 : i32
    %c0_i32_0 = arith.constant 0 : i32
    return %arg0, %c0_i32 : i32, i32
  }
}

</mosaic_0001>

<llo_original>
// kernel: mona_forward.1
$region0: #{mona_forward.1}
  #allocation0 [shape = 'u32[]', space=smem, size = 0x4, offset = 0x4, fixed_abs, tag = 'smem constant byte address 0x4 - core index']
  #allocation1 [shape = 'u32[72,128]{1,0:T(1,128)}', space=vmem, size = 0x9000, scoped, tag = 'internal scratch']
  %s0 = inlined_call_operand.vmem [shape: f32[128,32], index: 0, kind: input, shape index: {}]
  %s1 = inlined_call_operand.vmem [shape: f32[32,4], index: 1, kind: input, shape index: {}]
  %s2 = inlined_call_operand.vmem [shape: f32[72,32], index: 2, kind: input, shape index: {}]
  %s3 = inlined_call_operand.vmem [shape: f32[72,1], index: 3, kind: input, shape index: {}]
  %s4 = inlined_call_operand.vmem [shape: f32[64,64], index: 4, kind: input, shape index: {}]
  %s5 = inlined_call_operand.vmem [shape: f32[64,1], index: 5, kind: input, shape index: {}]
  %s6 = inlined_call_operand.vmem [shape: f32[32,64], index: 6, kind: input, shape index: {}]
  %s7 = inlined_call_operand.vmem [shape: f32[128,32], index: 7, kind: output, shape index: {}]
  %s8 = sld [smem:[#allocation0]]
  $region38: #{mona_forward.1} parent=0
    _
  %s10 = ssub.s32 1, %s8
  %s11 = scalar_select 0, %s10, %s8
  // Predicated region
  $region2: #{mona_forward.1} parent=0 // pred_check
    _
  $region3: #{mona_forward.1} parent=0 // pred_check_branch
    %13 = sbr.rel (0) target = $region5
  $region4: #{mona_forward.1} parent=0 // pred_region
    _
  $region5: #{mona_forward.1} parent=0 // pred_fallthru
    _
  // Predicated region
  $region6: #{mona_forward.1} parent=0 // pred_check
    _
  $region7: #{mona_forward.1} parent=0 // pred_check_branch
    %15 = sbr.rel (0) target = $region9
  $region8: #{mona_forward.1} parent=0 // pred_region
    _
  $region9: #{mona_forward.1} parent=0 // pred_fallthru
    _
  // Predicated region
  $region10: #{mona_forward.1} parent=0 // pred_check
    _
  $region11: #{mona_forward.1} parent=0 // pred_check_branch
    %17 = sbr.rel (0) target = $region13
  $region12: #{mona_forward.1} parent=0 // pred_region
    _
  $region13: #{mona_forward.1} parent=0 // pred_fallthru
    _
  // Predicated region
  $region14: #{mona_forward.1} parent=0 // pred_check
    _
  $region15: #{mona_forward.1} parent=0 // pred_check_branch
    %19 = sbr.rel (0) target = $region17
  $region16: #{mona_forward.1} parent=0 // pred_region
    _
  $region17: #{mona_forward.1} parent=0 // pred_fallthru
    _
  // Predicated region
  $region18: #{mona_forward.1} parent=0 // pred_check
    _
  $region19: #{mona_forward.1} parent=0 // pred_check_branch
    %21 = sbr.rel (0) target = $region21
  $region20: #{mona_forward.1} parent=0 // pred_region
    _
  $region21: #{mona_forward.1} parent=0 // pred_fallthru
    _
  // Predicated region
  $region22: #{mona_forward.1} parent=0 // pred_check
    _
  $region23: #{mona_forward.1} parent=0 // pred_check_branch
    %23 = sbr.rel (0) target = $region25
  $region24: #{mona_forward.1} parent=0 // pred_region
    _
  $region25: #{mona_forward.1} parent=0 // pred_fallthru
    _
  // Predicated region
  $region26: #{mona_forward.1} parent=0 // pred_check
    _
  $region27: #{mona_forward.1} parent=0 // pred_check_branch
    %25 = sbr.rel (0) target = $region29
  $region28: #{mona_forward.1} parent=0 // pred_region
    _
  $region29: #{mona_forward.1} parent=0 // pred_fallthru
    _
  %v26 = vld [vmem:[%s0] sm:$0xff]
  %v27 = vld [vmem:[%s0 + $0x8] sm:$0xff]
  %v28 = vld [vmem:[%s0 + $0x10] sm:$0xff]
  %v29 = vld [vmem:[%s0 + $0x18] sm:$0xff]
  %v30 = vld [vmem:[%s0 + $0x20] sm:$0xff]
  %v31 = vld [vmem:[%s0 + $0x28] sm:$0xff]
  %v32 = vld [vmem:[%s0 + $0x30] sm:$0xff]
  %v33 = vld [vmem:[%s0 + $0x38] sm:$0xff]
  %v34 = vld [vmem:[%s0 + $0x40] sm:$0xff]
  %v35 = vld [vmem:[%s0 + $0x48] sm:$0xff]
  %v36 = vld [vmem:[%s0 + $0x50] sm:$0xff]
  %v37 = vld [vmem:[%s0 + $0x58] sm:$0xff]
  %v38 = vld [vmem:[%s0 + $0x60] sm:$0xff]
  %v39 = vld [vmem:[%s0 + $0x68] sm:$0xff]
  %v40 = vld [vmem:[%s0 + $0x70] sm:$0xff]
  %v41 = vld [vmem:[%s0 + $0x78] sm:$0xff]
  %42 = vxpose.xlu0.b32.start [1/16] %v26, 128
  %43 = vxpose.xlu0.b32.cont [2/16] %v27, 128
  %44 = vxpose.xlu0.b32.cont [3/16] %v28, 128
  %45 = vxpose.xlu0.b32.cont [4/16] %v29, 128
  %46 = vxpose.xlu0.b32.cont [5/16] %v30, 128
  %47 = vxpose.xlu0.b32.cont [6/16] %v31, 128
  %48 = vxpose.xlu0.b32.cont [7/16] %v32, 128
  %49 = vxpose.xlu0.b32.cont [8/16] %v33, 128
  %50 = vxpose.xlu0.b32.cont [9/16] %v34, 128
  %51 = vxpose.xlu0.b32.cont [10/16] %v35, 128
  %52 = vxpose.xlu0.b32.cont [11/16] %v36, 128
  %53 = vxpose.xlu0.b32.cont [12/16] %v37, 128
  %54 = vxpose.xlu0.b32.cont [13/16] %v38, 128
  %55 = vxpose.xlu0.b32.cont [14/16] %v39, 128
  %56 = vxpose.xlu0.b32.cont [15/16] %v40, 128
  %57 = vxpose.xlu0.b32.end [16/16] %v41, 128
  %v58 = vpop.trf.xlu0
  %v59 = vpop.trf.xlu0
  %v60 = vpop.trf.xlu0
  %v61 = vpop.trf.xlu0
  %v62 = vpop.trf.xlu0
  %v63 = vpop.trf.xlu0
  %v64 = vpop.trf.xlu0
  %v65 = vpop.trf.xlu0
  %v66 = vpop.trf.xlu0
  %v67 = vpop.trf.xlu0
  %v68 = vpop.trf.xlu0
  %v69 = vpop.trf.xlu0
  %v70 = vpop.trf.xlu0
  %v71 = vpop.trf.xlu0
  %v72 = vpop.trf.xlu0
  %v73 = vpop.trf.xlu0
  %v74 = vld [vmem:[%s1] sm:$0xff]
  %v75 = vld [vmem:[%s1 + $0x8] sm:$0xff]
  %v76 = vld [vmem:[%s1 + $0x10] sm:$0xff]
  %v77 = vld [vmem:[%s1 + $0x18] sm:$0xff]
  %v78 = vadd.f32 %v58, %v59
  %v79 = vadd.f32 %v78, %v60
  %v80 = vadd.f32 %v79, %v61
  %v81 = vrot.slane %v80, 4
  %v82 = vadd.f32 %v80, %v81
  %v83 = vrot.slane %v82, 2
  %v84 = vadd.f32 %v82, %v83
  %v85 = vrot.slane %v84, 1
  %v86 = vadd.f32 %v84, %v85
  %v87 = vrcp.pop 32.0
  %v88 = vmul.f32 32.0, %v87
  %v89 = vsub.f32 1.0, %v88
  %v90 = vmul.f32 %v87, %v89
  %v91 = vadd.f32 %v87, %v90
  %vm92 = vweird.f32 %v87
  %v93 = vsel %vm92, %v87, %v91
  %v94 = vmul.f32 %v86, %v93
  %v95 = vsub.f32 %v58, %v94
  %v96 = vsub.f32 %v59, %v94
  %v97 = vsub.f32 %v60, %v94
  %v98 = vsub.f32 %v61, %v94
  %v99 = vmul.f32 %v95, %v95
  %v100 = vmul.f32 %v96, %v96
  %v101 = vmul.f32 %v97, %v97
  %v102 = vmul.f32 %v98, %v98
  %v103 = vadd.f32 %v99, %v100
  %v104 = vadd.f32 %v103, %v101
  %v105 = vadd.f32 %v104, %v102
  %v106 = vrot.slane %v105, 4
  %v107 = vadd.f32 %v105, %v106
  %v108 = vrot.slane %v107, 2
  %v109 = vadd.f32 %v107, %v108
  %v110 = vrot.slane %v109, 1
  %v111 = vadd.f32 %v109, %v110
  %v112 = vmul.f32 %v111, %v93
  %v113 = vadd.f32 %v112, 1e-05
  %v114 = vrsqrt.pop %v113
  %v115 = vmul.f32 %v114, %v113
  %v116 = vmul.f32 %v115, %v114
  %v117 = vmul.f32 0.5, %v116
  %v118 = vsub.f32 1.5, %v117
  %v119 = vmul.f32 %v114, %v118
  %vm120 = vweird.f32 %v113
  %vm121 = vweird.f32 %v114
  %vm122 = vmor %vm120, %vm121
  %v123 = vsel %vm122, %v114, %v119
  %v124 = vmul.f32 %v95, %v123
  %v125 = vmul.f32 %v96, %v123
  %v126 = vmul.f32 %v97, %v123
  %v127 = vmul.f32 %v98, %v123
  %129 = vset.pattern.permute.xlu0 0
  %130 = vperm.xlu0 %129, %v74
  %v131 = vpop.permute.xlu0 %130
  %134 = vset.pattern.permute.xlu0 0
  %135 = vperm.xlu0 %134, %v75
  %v136 = vpop.permute.xlu0 %135
  %139 = vset.pattern.permute.xlu0 0
  %140 = vperm.xlu0 %139, %v76
  %v141 = vpop.permute.xlu0 %140
  %144 = vset.pattern.permute.xlu0 0
  %145 = vperm.xlu0 %144, %v77
  %v146 = vpop.permute.xlu0 %145
  %v148 = vmul.f32 %v124, %v131
  %v149 = vmul.f32 %v125, %v136
  %v150 = vmul.f32 %v126, %v141
  %v151 = vmul.f32 %v127, %v146
  %152 = vset.pattern.permute.xlu0 1
  %153 = vperm.xlu0 %152, %v74
  %v154 = vpop.permute.xlu0 %153
  %156 = vset.pattern.permute.xlu0 1
  %157 = vperm.xlu0 %156, %v75
  %v158 = vpop.permute.xlu0 %157
  %160 = vset.pattern.permute.xlu0 1
  %161 = vperm.xlu0 %160, %v76
  %v162 = vpop.permute.xlu0 %161
  %164 = vset.pattern.permute.xlu0 1
  %165 = vperm.xlu0 %164, %v77
  %v166 = vpop.permute.xlu0 %165
  %v168 = vadd.f32 %v148, %v154
  %v169 = vadd.f32 %v149, %v158
  %v170 = vadd.f32 %v150, %v162
  %v171 = vadd.f32 %v151, %v166
  %172 = vset.pattern.permute.xlu0 2
  %173 = vperm.xlu0 %172, %v74
  %v174 = vpop.permute.xlu0 %173
  %176 = vset.pattern.permute.xlu0 2
  %177 = vperm.xlu0 %176, %v75
  %v178 = vpop.permute.xlu0 %177
  %180 = vset.pattern.permute.xlu0 2
  %181 = vperm.xlu0 %180, %v76
  %v182 = vpop.permute.xlu0 %181
  %184 = vset.pattern.permute.xlu0 2
  %185 = vperm.xlu0 %184, %v77
  %v186 = vpop.permute.xlu0 %185
  %v188 = vmul.f32 %v58, %v174
  %v189 = vmul.f32 %v59, %v178
  %v190 = vmul.f32 %v60, %v182
  %v191 = vmul.f32 %v61, %v186
  %v192 = vadd.f32 %v168, %v188
  %v193 = vadd.f32 %v169, %v189
  %v194 = vadd.f32 %v170, %v190
  %v195 = vadd.f32 %v171, %v191
  %v196 = vld [vmem:[%s2] sm:$0xff]
  %v197 = vld [vmem:[%s2 + $0x8] sm:$0xff]
  %v198 = vld [vmem:[%s2 + $0x10] sm:$0xff]
  %v199 = vld [vmem:[%s2 + $0x18] sm:$0xff]
  %v200 = vld [vmem:[%s2 + $0x20] sm:$0xff]
  %v201 = vld [vmem:[%s2 + $0x28] sm:$0xff]
  %v202 = vld [vmem:[%s2 + $0x30] sm:$0xff]
  %v203 = vld [vmem:[%s2 + $0x38] sm:$0xff]
  %v204 = vld [vmem:[%s2 + $0x40] sm:$0xff]
  %v205 = vld [vmem:[%s3] sm:$0xff]
  %v206 = vld [vmem:[%s3 + $0x8] sm:$0xff]
  %v207 = vld [vmem:[%s3 + $0x10] sm:$0xff]
  %v208 = vld [vmem:[%s3 + $0x18] sm:$0xff]
  %v209 = vld [vmem:[%s3 + $0x20] sm:$0xff]
  %v210 = vld [vmem:[%s3 + $0x28] sm:$0xff]
  %v211 = vld [vmem:[%s3 + $0x30] sm:$0xff]
  %v212 = vld [vmem:[%s3 + $0x38] sm:$0xff]
  %v213 = vld [vmem:[%s3 + $0x40] sm:$0xff]
  %215 = vset.pattern.permute.xlu0 0
  %216 = vperm.xlu0 %215, %v205
  %v217 = vpop.permute.xlu0 %216
  %220 = vset.pattern.permute.xlu0 0
  %221 = vperm.xlu0 %220, %v206
  %v222 = vpop.permute.xlu0 %221
  %225 = vset.pattern.permute.xlu0 0
  %226 = vperm.xlu0 %225, %v207
  %v227 = vpop.permute.xlu0 %226
  %230 = vset.pattern.permute.xlu0 0
  %231 = vperm.xlu0 %230, %v208
  %v232 = vpop.permute.xlu0 %231
  %235 = vset.pattern.permute.xlu0 0
  %236 = vperm.xlu0 %235, %v209
  %v237 = vpop.permute.xlu0 %236
  %240 = vset.pattern.permute.xlu0 0
  %241 = vperm.xlu0 %240, %v210
  %v242 = vpop.permute.xlu0 %241
  %245 = vset.pattern.permute.xlu0 0
  %246 = vperm.xlu0 %245, %v211
  %v247 = vpop.permute.xlu0 %246
  %250 = vset.pattern.permute.xlu0 0
  %251 = vperm.xlu0 %250, %v212
  %v252 = vpop.permute.xlu0 %251
  %255 = vset.pattern.permute.xlu0 0
  %256 = vperm.xlu0 %255, %v213
  %v257 = vpop.permute.xlu0 %256
  %vm259 = vcmask 261120
  %v261 = vsel %vm259, %v196, 0
  %v264 = vsel %vm259, %v197, 0
  %v267 = vsel %vm259, %v198, 0
  %v270 = vsel %vm259, %v199, 0
  %v273 = vsel %vm259, %v200, 0
  %v276 = vsel %vm259, %v201, 0
  %v279 = vsel %vm259, %v202, 0
  %v282 = vsel %vm259, %v203, 0
  %v285 = vsel %vm259, %v204, 0
  %287 = vmatpush.msra.mxu0 0.0
  %288 = vmatpush.msra.mxu0 0.0
  %289 = vmatpush.msra.mxu0 0.0
  %290 = vmatpush.msra.mxu0 0.0
  %291 = vmatpush.msra.mxu0 0.0
  %292 = vmatpush.msra.mxu0 0.0
  %293 = vmatpush.msra.mxu0 0.0
  %294 = vmatpush.msra.mxu0 0.0
  %295 = vmatpush.msra.mxu0 0.0
  %296 = vmatpush.msra.mxu0 0.0
  %297 = vmatpush.msra.mxu0 0.0
  %298 = vmatpush.msra.mxu0 0.0
  %299 = vmatpush.msra.mxu0 %v195
  %300 = vmatpush.msra.mxu0 %v194
  %301 = vmatpush.msra.mxu0 %v193
  %302 = vmatpush.msra.mxu0 %v192
  %303 = vmatmul.f32.gmra.mxu0 %v261
  %v304 = vpop.f32.mrf.mxu0
  %v305 = vadd.f32 %v217, %v304
  %306 = vmatmul.f32.gmra.mxu0 %v264
  %v307 = vpop.f32.mrf.mxu0
  %v308 = vadd.f32 %v222, %v307
  %309 = vmatmul.f32.gmra.mxu0 %v267
  %v310 = vpop.f32.mrf.mxu0
  %v311 = vadd.f32 %v227, %v310
  %312 = vmatmul.f32.gmra.mxu0 %v270
  %v313 = vpop.f32.mrf.mxu0
  %v314 = vadd.f32 %v232, %v313
  %315 = vmatmul.f32.gmra.mxu0 %v273
  %v316 = vpop.f32.mrf.mxu0
  %v317 = vadd.f32 %v237, %v316
  %318 = vmatmul.f32.gmra.mxu0 %v276
  %v319 = vpop.f32.mrf.mxu0
  %v320 = vadd.f32 %v242, %v319
  %321 = vmatmul.f32.gmra.mxu0 %v279
  %v322 = vpop.f32.mrf.mxu0
  %v323 = vadd.f32 %v247, %v322
  %324 = vmatmul.f32.gmra.mxu0 %v282
  %v325 = vpop.f32.mrf.mxu0
  %v326 = vadd.f32 %v252, %v325
  %327 = vmatmul.f32.gmra.mxu0 %v285
  %v328 = vpop.f32.mrf.mxu0
  %v329 = vadd.f32 %v257, %v328
  %330 = vdwg.mxu0
  %v331 = vmul.f32 %v305, %v305
  %v332 = vmul.f32 %v308, %v308
  %v333 = vmul.f32 %v311, %v311
  %v334 = vmul.f32 %v314, %v314
  %v335 = vmul.f32 %v317, %v317
  %v336 = vmul.f32 %v320, %v320
  %v337 = vmul.f32 %v323, %v323
  %v338 = vmul.f32 %v326, %v326
  %v339 = vadd.f32 %v331, %v332
  %v340 = vadd.f32 %v339, %v333
  %v341 = vadd.f32 %v340, %v334
  %v342 = vadd.f32 %v341, %v335
  %v343 = vadd.f32 %v342, %v336
  %v344 = vadd.f32 %v343, %v337
  %v345 = vadd.f32 %v344, %v338
  %v346 = vrot.slane %v345, 4
  %v347 = vadd.f32 %v345, %v346
  %v348 = vrot.slane %v347, 2
  %v349 = vadd.f32 %v347, %v348
  %v350 = vrot.slane %v349, 1
  %v351 = vadd.f32 %v349, %v350
  %v352 = vmax.f32 %v351, 1e-24
  %v353 = vrsqrt.pop %v352
  %v354 = vmul.f32 %v353, %v352
  %v355 = vmul.f32 %v354, %v353
  %v356 = vmul.f32 0.5, %v355
  %v357 = vsub.f32 1.5, %v356
  %v358 = vmul.f32 %v353, %v357
  %vm359 = vweird.f32 %v352
  %vm360 = vweird.f32 %v353
  %vm361 = vmor %vm359, %vm360
  %v362 = vsel %vm361, %v353, %v358
  %v363 = vmul.f32 %v329, %v362
  %v364 = vmax.f32 %v363, 0.0
  %v365 = vmin.f32 %v364, 1.0
  %v366 = vld [vmem:[%s4] sm:$0xff]
  %v367 = vld [vmem:[%s4 + $0x8] sm:$0xff]
  %v368 = vld [vmem:[%s4 + $0x10] sm:$0xff]
  %v369 = vld [vmem:[%s4 + $0x18] sm:$0xff]
  %v370 = vld [vmem:[%s4 + $0x20] sm:$0xff]
  %v371 = vld [vmem:[%s4 + $0x28] sm:$0xff]
  %v372 = vld [vmem:[%s4 + $0x30] sm:$0xff]
  %v373 = vld [vmem:[%s4 + $0x38] sm:$0xff]
  %v374 = vperm.slane %v365, 0
  %v375 = vmul.f32 %v305, %v374
  %v376 = vmul.f32 %v308, %v374
  %v377 = vmul.f32 %v311, %v374
  %v378 = vmul.f32 %v314, %v374
  %v379 = vmul.f32 %v317, %v374
  %v380 = vmul.f32 %v320, %v374
  %v381 = vmul.f32 %v323, %v374
  %v382 = vmul.f32 %v326, %v374
  %v383 = vld [vmem:[%s5] sm:$0xff]
  %v384 = vld [vmem:[%s5 + $0x8] sm:$0xff]
  %v385 = vld [vmem:[%s5 + $0x10] sm:$0xff]
  %v386 = vld [vmem:[%s5 + $0x18] sm:$0xff]
  %v387 = vld [vmem:[%s5 + $0x20] sm:$0xff]
  %v388 = vld [vmem:[%s5 + $0x28] sm:$0xff]
  %v389 = vld [vmem:[%s5 + $0x30] sm:$0xff]
  %v390 = vld [vmem:[%s5 + $0x38] sm:$0xff]
  %392 = vset.pattern.permute.xlu0 0
  %393 = vperm.xlu0 %392, %v383
  %v394 = vpop.permute.xlu0 %393
  %397 = vset.pattern.permute.xlu0 0
  %398 = vperm.xlu0 %397, %v384
  %v399 = vpop.permute.xlu0 %398
  %402 = vset.pattern.permute.xlu0 0
  %403 = vperm.xlu0 %402, %v385
  %v404 = vpop.permute.xlu0 %403
  %407 = vset.pattern.permute.xlu0 0
  %408 = vperm.xlu0 %407, %v386
  %v409 = vpop.permute.xlu0 %408
  %412 = vset.pattern.permute.xlu0 0
  %413 = vperm.xlu0 %412, %v387
  %v414 = vpop.permute.xlu0 %413
  %417 = vset.pattern.permute.xlu0 0
  %418 = vperm.xlu0 %417, %v388
  %v419 = vpop.permute.xlu0 %418
  %422 = vset.pattern.permute.xlu0 0
  %423 = vperm.xlu0 %422, %v389
  %v424 = vpop.permute.xlu0 %423
  %427 = vset.pattern.permute.xlu0 0
  %428 = vperm.xlu0 %427, %v390
  %v429 = vpop.permute.xlu0 %428
  %vm431 = vcmask 523264
  %v433 = vsel %vm431, %v366, 0
  %v436 = vsel %vm431, %v367, 0
  %v439 = vsel %vm431, %v368, 0
  %v442 = vsel %vm431, %v369, 0
  %v445 = vsel %vm431, %v370, 0
  %v448 = vsel %vm431, %v371, 0
  %v451 = vsel %vm431, %v372, 0
  %v454 = vsel %vm431, %v373, 0
  %456 = vmatpush.msra.mxu0 0.0
  %457 = vmatpush.msra.mxu0 0.0
  %458 = vmatpush.msra.mxu0 0.0
  %459 = vmatpush.msra.mxu0 0.0
  %460 = vmatpush.msra.mxu0 0.0
  %461 = vmatpush.msra.mxu0 0.0
  %462 = vmatpush.msra.mxu0 0.0
  %463 = vmatpush.msra.mxu0 0.0
  %464 = vmatpush.msra.mxu0 %v382
  %465 = vmatpush.msra.mxu0 %v381
  %466 = vmatpush.msra.mxu0 %v380
  %467 = vmatpush.msra.mxu0 %v379
  %468 = vmatpush.msra.mxu0 %v378
  %469 = vmatpush.msra.mxu0 %v377
  %470 = vmatpush.msra.mxu0 %v376
  %471 = vmatpush.msra.mxu0 %v375
  %472 = vmatmul.f32.gmra.mxu0 %v433
  %v473 = vpop.f32.mrf.mxu0
  %v474 = vadd.f32 %v394, %v473
  %475 = vmatmul.f32.gmra.mxu0 %v436
  %v476 = vpop.f32.mrf.mxu0
  %v477 = vadd.f32 %v399, %v476
  %478 = vmatmul.f32.gmra.mxu0 %v439
  %v479 = vpop.f32.mrf.mxu0
  %v480 = vadd.f32 %v404, %v479
  %481 = vmatmul.f32.gmra.mxu0 %v442
  %v482 = vpop.f32.mrf.mxu0
  %v483 = vadd.f32 %v409, %v482
  %484 = vmatmul.f32.gmra.mxu0 %v445
  %v485 = vpop.f32.mrf.mxu0
  %v486 = vadd.f32 %v414, %v485
  %487 = vmatmul.f32.gmra.mxu0 %v448
  %v488 = vpop.f32.mrf.mxu0
  %v489 = vadd.f32 %v419, %v488
  %490 = vmatmul.f32.gmra.mxu0 %v451
  %v491 = vpop.f32.mrf.mxu0
  %v492 = vadd.f32 %v424, %v491
  %493 = vmatmul.f32.gmra.mxu0 %v454
  %v494 = vpop.f32.mrf.mxu0
  %v495 = vadd.f32 %v429, %v494
  %496 = vdwg.mxu0
  %v497 = vadd.f32 %v305, %v474
  %v498 = vadd.f32 %v308, %v477
  %v499 = vadd.f32 %v311, %v480
  %v500 = vadd.f32 %v314, %v483
  %v501 = vadd.f32 %v317, %v486
  %v502 = vadd.f32 %v320, %v489
  %v503 = vadd.f32 %v323, %v492
  %v504 = vadd.f32 %v326, %v495
  %v505 = vmul.f32 %v497, 0.5
  %v506 = vmul.f32 %v498, 0.5
  %v507 = vmul.f32 %v499, 0.5
  %v508 = vmul.f32 %v500, 0.5
  %v509 = vmul.f32 %v501, 0.5
  %v510 = vmul.f32 %v502, 0.5
  %v511 = vmul.f32 %v503, 0.5
  %v512 = vmul.f32 %v504, 0.5
  %v513 = vmul.f32 %v497, 0.70710677
  %v514 = vmul.f32 %v498, 0.70710677
  %v515 = vmul.f32 %v499, 0.70710677
  %v516 = vmul.f32 %v500, 0.70710677
  %v517 = vmul.f32 %v501, 0.70710677
  %v518 = vmul.f32 %v502, 0.70710677
  %v519 = vmul.f32 %v503, 0.70710677
  %v520 = vmul.f32 %v504, 0.70710677
  %v521 = vand.u32 2147483647, %v513
  %v522 = vand.u32 2147483647, %v514
  %v523 = vand.u32 2147483647, %v515
  %v524 = vand.u32 2147483647, %v516
  %v525 = vand.u32 2147483647, %v517
  %v526 = vand.u32 2147483647, %v518
  %v527 = vand.u32 2147483647, %v519
  %v528 = vand.u32 2147483647, %v520
  %v529 = vmul.f32 %v521, 0.3275911
  %v530 = vmul.f32 %v522, 0.3275911
  %v531 = vmul.f32 %v523, 0.3275911
  %v532 = vmul.f32 %v524, 0.3275911
  %v533 = vmul.f32 %v525, 0.3275911
  %v534 = vmul.f32 %v526, 0.3275911
  %v535 = vmul.f32 %v527, 0.3275911
  %v536 = vmul.f32 %v528, 0.3275911
  %v537 = vadd.f32 %v529, 1.0
  %v538 = vadd.f32 %v530, 1.0
  %v539 = vadd.f32 %v531, 1.0
  %v540 = vadd.f32 %v532, 1.0
  %v541 = vadd.f32 %v533, 1.0
  %v542 = vadd.f32 %v534, 1.0
  %v543 = vadd.f32 %v535, 1.0
  %v544 = vadd.f32 %v536, 1.0
  %v545 = vrcp.pop %v537
  %v546 = vmul.f32 %v537, %v545
  %v547 = vsub.f32 1.0, %v546
  %v548 = vmul.f32 %v545, %v547
  %v549 = vadd.f32 %v545, %v548
  %vm550 = vweird.f32 %v537
  %vm551 = vweird.f32 %v545
  %vm552 = vmor %vm550, %vm551
  %v553 = vsel %vm552, %v545, %v549
  %v554 = vand.u32 2147483647, %v537
  %vm555 = vcmp.eq.f32.partialorder %v554, 8.507059e+37
  %v556 = vand.u32 %v537, 2147483648
  %v557 = vor.u32 1.1754944e-38, %v556
  %v558 = vsel %vm555, %v557, %v553
  %v559 = vmul.f32 1.0, %v558
  %v560 = vrcp.pop %v538
  %v561 = vmul.f32 %v538, %v560
  %v562 = vsub.f32 1.0, %v561
  %v563 = vmul.f32 %v560, %v562
  %v564 = vadd.f32 %v560, %v563
  %vm565 = vweird.f32 %v538
  %vm566 = vweird.f32 %v560
  %vm567 = vmor %vm565, %vm566
  %v568 = vsel %vm567, %v560, %v564
  %v569 = vand.u32 2147483647, %v538
  %vm570 = vcmp.eq.f32.partialorder %v569, 8.507059e+37
  %v571 = vand.u32 %v538, 2147483648
  %v572 = vor.u32 1.1754944e-38, %v571
  %v573 = vsel %vm570, %v572, %v568
  %v574 = vmul.f32 1.0, %v573
  %v575 = vrcp.pop %v539
  %v576 = vmul.f32 %v539, %v575
  %v577 = vsub.f32 1.0, %v576
  %v578 = vmul.f32 %v575, %v577
  %v579 = vadd.f32 %v575, %v578
  %vm580 = vweird.f32 %v539
  %vm581 = vweird.f32 %v575
  %vm582 = vmor %vm580, %vm581
  %v583 = vsel %vm582, %v575, %v579
  %v584 = vand.u32 2147483647, %v539
  %vm585 = vcmp.eq.f32.partialorder %v584, 8.507059e+37
  %v586 = vand.u32 %v539, 2147483648
  %v587 = vor.u32 1.1754944e-38, %v586
  %v588 = vsel %vm585, %v587, %v583
  %v589 = vmul.f32 1.0, %v588
  %v590 = vrcp.pop %v540
  %v591 = vmul.f32 %v540, %v590
  %v592 = vsub.f32 1.0, %v591
  %v593 = vmul.f32 %v590, %v592
  %v594 = vadd.f32 %v590, %v593
  %vm595 = vweird.f32 %v540
  %vm596 = vweird.f32 %v590
  %vm597 = vmor %vm595, %vm596
  %v598 = vsel %vm597, %v590, %v594
  %v599 = vand.u32 2147483647, %v540
  %vm600 = vcmp.eq.f32.partialorder %v599, 8.507059e+37
  %v601 = vand.u32 %v540, 2147483648
  %v602 = vor.u32 1.1754944e-38, %v601
  %v603 = vsel %vm600, %v602, %v598
  %v604 = vmul.f32 1.0, %v603
  %v605 = vrcp.pop %v541
  %v606 = vmul.f32 %v541, %v605
  %v607 = vsub.f32 1.0, %v606
  %v608 = vmul.f32 %v605, %v607
  %v609 = vadd.f32 %v605, %v608
  %vm610 = vweird.f32 %v541
  %vm611 = vweird.f32 %v605
  %vm612 = vmor %vm610, %vm611
  %v613 = vsel %vm612, %v605, %v609
  %v614 = vand.u32 2147483647, %v541
  %vm615 = vcmp.eq.f32.partialorder %v614, 8.507059e+37
  %v616 = vand.u32 %v541, 2147483648
  %v617 = vor.u32 1.1754944e-38, %v616
  %v618 = vsel %vm615, %v617, %v613
  %v619 = vmul.f32 1.0, %v618
  %v620 = vrcp.pop %v542
  %v621 = vmul.f32 %v542, %v620
  %v622 = vsub.f32 1.0, %v621
  %v623 = vmul.f32 %v620, %v622
  %v624 = vadd.f32 %v620, %v623
  %vm625 = vweird.f32 %v542
  %vm626 = vweird.f32 %v620
  %vm627 = vmor %vm625, %vm626
  %v628 = vsel %vm627, %v620, %v624
  %v629 = vand.u32 2147483647, %v542
  %vm630 = vcmp.eq.f32.partialorder %v629, 8.507059e+37
  %v631 = vand.u32 %v542, 2147483648
  %v632 = vor.u32 1.1754944e-38, %v631
  %v633 = vsel %vm630, %v632, %v628
  %v634 = vmul.f32 1.0, %v633
  %v635 = vrcp.pop %v543
  %v636 = vmul.f32 %v543, %v635
  %v637 = vsub.f32 1.0, %v636
  %v638 = vmul.f32 %v635, %v637
  %v639 = vadd.f32 %v635, %v638
  %vm640 = vweird.f32 %v543
  %vm641 = vweird.f32 %v635
  %vm642 = vmor %vm640, %vm641
  %v643 = vsel %vm642, %v635, %v639
  %v644 = vand.u32 2147483647, %v543
  %vm645 = vcmp.eq.f32.partialorder %v644, 8.507059e+37
  %v646 = vand.u32 %v543, 2147483648
  %v647 = vor.u32 1.1754944e-38, %v646
  %v648 = vsel %vm645, %v647, %v643
  %v649 = vmul.f32 1.0, %v648
  %v650 = vrcp.pop %v544
  %v651 = vmul.f32 %v544, %v650
  %v652 = vsub.f32 1.0, %v651
  %v653 = vmul.f32 %v650, %v652
  %v654 = vadd.f32 %v650, %v653
  %vm655 = vweird.f32 %v544
  %vm656 = vweird.f32 %v650
  %vm657 = vmor %vm655, %vm656
  %v658 = vsel %vm657, %v650, %v654
  %v659 = vand.u32 2147483647, %v544
  %vm660 = vcmp.eq.f32.partialorder %v659, 8.507059e+37
  %v661 = vand.u32 %v544, 2147483648
  %v662 = vor.u32 1.1754944e-38, %v661
  %v663 = vsel %vm660, %v662, %v658
  %v664 = vmul.f32 1.0, %v663
  %v665 = vmul.f32 %v559, 1.0614054
  %v666 = vmul.f32 %v574, 1.0614054
  %v667 = vmul.f32 %v589, 1.0614054
  %v668 = vmul.f32 %v604, 1.0614054
  %v669 = vmul.f32 %v619, 1.0614054
  %v670 = vmul.f32 %v634, 1.0614054
  %v671 = vmul.f32 %v649, 1.0614054
  %v672 = vmul.f32 %v664, 1.0614054
  %v673 = vadd.f32 %v665, -1.4531521
  %v674 = vadd.f32 %v666, -1.4531521
  %v675 = vadd.f32 %v667, -1.4531521
  %v676 = vadd.f32 %v668, -1.4531521
  %v677 = vadd.f32 %v669, -1.4531521
  %v678 = vadd.f32 %v670, -1.4531521
  %v679 = vadd.f32 %v671, -1.4531521
  %v680 = vadd.f32 %v672, -1.4531521
  %v681 = vmul.f32 %v673, %v559
  %v682 = vmul.f32 %v674, %v574
  %v683 = vmul.f32 %v675, %v589
  %v684 = vmul.f32 %v676, %v604
  %v685 = vmul.f32 %v677, %v619
  %v686 = vmul.f32 %v678, %v634
  %v687 = vmul.f32 %v679, %v649
  %v688 = vmul.f32 %v680, %v664
  %v689 = vadd.f32 %v681, 1.4214138
  %v690 = vadd.f32 %v682, 1.4214138
  %v691 = vadd.f32 %v683, 1.4214138
  %v692 = vadd.f32 %v684, 1.4214138
  %v693 = vadd.f32 %v685, 1.4214138
  %v694 = vadd.f32 %v686, 1.4214138
  %v695 = vadd.f32 %v687, 1.4214138
  %v696 = vadd.f32 %v688, 1.4214138
  %v697 = vmul.f32 %v689, %v559
  %v698 = vmul.f32 %v690, %v574
  %v699 = vmul.f32 %v691, %v589
  %v700 = vmul.f32 %v692, %v604
  %v701 = vmul.f32 %v693, %v619
  %v702 = vmul.f32 %v694, %v634
  %v703 = vmul.f32 %v695, %v649
  %v704 = vmul.f32 %v696, %v664
  %v705 = vadd.f32 %v697, -0.28449672
  %v706 = vadd.f32 %v698, -0.28449672
  %v707 = vadd.f32 %v699, -0.28449672
  %v708 = vadd.f32 %v700, -0.28449672
  %v709 = vadd.f32 %v701, -0.28449672
  %v710 = vadd.f32 %v702, -0.28449672
  %v711 = vadd.f32 %v703, -0.28449672
  %v712 = vadd.f32 %v704, -0.28449672
  %v713 = vmul.f32 %v705, %v559
  %v714 = vmul.f32 %v706, %v574
  %v715 = vmul.f32 %v707, %v589
  %v716 = vmul.f32 %v708, %v604
  %v717 = vmul.f32 %v709, %v619
  %v718 = vmul.f32 %v710, %v634
  %v719 = vmul.f32 %v711, %v649
  %v720 = vmul.f32 %v712, %v664
  %v721 = vadd.f32 %v713, 0.2548296
  %v722 = vadd.f32 %v714, 0.2548296
  %v723 = vadd.f32 %v715, 0.2548296
  %v724 = vadd.f32 %v716, 0.2548296
  %v725 = vadd.f32 %v717, 0.2548296
  %v726 = vadd.f32 %v718, 0.2548296
  %v727 = vadd.f32 %v719, 0.2548296
  %v728 = vadd.f32 %v720, 0.2548296
  %v729 = vmul.f32 %v721, %v559
  %v730 = vmul.f32 %v722, %v574
  %v731 = vmul.f32 %v723, %v589
  %v732 = vmul.f32 %v724, %v604
  %v733 = vmul.f32 %v725, %v619
  %v734 = vmul.f32 %v726, %v634
  %v735 = vmul.f32 %v727, %v649
  %v736 = vmul.f32 %v728, %v664
  %v737 = vsub.f32 0.0, %v521
  %v738 = vsub.f32 0.0, %v522
  %v739 = vsub.f32 0.0, %v523
  %v740 = vsub.f32 0.0, %v524
  %v741 = vsub.f32 0.0, %v525
  %v742 = vsub.f32 0.0, %v526
  %v743 = vsub.f32 0.0, %v527
  %v744 = vsub.f32 0.0, %v528
  %v745 = vmul.f32 %v737, %v521
  %v746 = vmul.f32 %v738, %v522
  %v747 = vmul.f32 %v739, %v523
  %v748 = vmul.f32 %v740, %v524
  %v749 = vmul.f32 %v741, %v525
  %v750 = vmul.f32 %v742, %v526
  %v751 = vmul.f32 %v743, %v527
  %v752 = vmul.f32 %v744, %v528
  %v753 = vmul.f32 %v745, 1.442695
  %v754 = vpow.pop %v753
  %v755 = vmul.f32 %v746, 1.442695
  %v756 = vpow.pop %v755
  %v757 = vmul.f32 %v747, 1.442695
  %v758 = vpow.pop %v757
  %v759 = vmul.f32 %v748, 1.442695
  %v760 = vpow.pop %v759
  %v761 = vmul.f32 %v749, 1.442695
  %v762 = vpow.pop %v761
  %v763 = vmul.f32 %v750, 1.442695
  %v764 = vpow.pop %v763
  %v765 = vmul.f32 %v751, 1.442695
  %v766 = vpow.pop %v765
  %v767 = vmul.f32 %v752, 1.442695
  %v768 = vpow.pop %v767
  %v769 = vmul.f32 %v729, %v754
  %v770 = vmul.f32 %v730, %v756
  %v771 = vmul.f32 %v731, %v758
  %v772 = vmul.f32 %v732, %v760
  %v773 = vmul.f32 %v733, %v762
  %v774 = vmul.f32 %v734, %v764
  %v775 = vmul.f32 %v735, %v766
  %v776 = vmul.f32 %v736, %v768
  %v777 = vsub.f32 1.0, %v769
  %v778 = vsub.f32 1.0, %v770
  %v779 = vsub.f32 1.0, %v771
  %v780 = vsub.f32 1.0, %v772
  %v781 = vsub.f32 1.0, %v773
  %v782 = vsub.f32 1.0, %v774
  %v783 = vsub.f32 1.0, %v775
  %v784 = vsub.f32 1.0, %v776
  %vm785 = vcmp.lt.f32.partialorder %v513, 0.0
  %vm786 = vcmp.lt.f32.partialorder %v514, 0.0
  %vm787 = vcmp.lt.f32.partialorder %v515, 0.0
  %vm788 = vcmp.lt.f32.partialorder %v516, 0.0
  %vm789 = vcmp.lt.f32.partialorder %v517, 0.0
  %vm790 = vcmp.lt.f32.partialorder %v518, 0.0
  %vm791 = vcmp.lt.f32.partialorder %v519, 0.0
  %vm792 = vcmp.lt.f32.partialorder %v520, 0.0
  %v793 = vsub.f32 0.0, %v777
  %v794 = vsub.f32 0.0, %v778
  %v795 = vsub.f32 0.0, %v779
  %v796 = vsub.f32 0.0, %v780
  %v797 = vsub.f32 0.0, %v781
  %v798 = vsub.f32 0.0, %v782
  %v799 = vsub.f32 0.0, %v783
  %v800 = vsub.f32 0.0, %v784
  %v801 = vsel %vm785, %v793, %v777
  %v802 = vsel %vm786, %v794, %v778
  %v803 = vsel %vm787, %v795, %v779
  %v804 = vsel %vm788, %v796, %v780
  %v805 = vsel %vm789, %v797, %v781
  %v806 = vsel %vm790, %v798, %v782
  %v807 = vsel %vm791, %v799, %v783
  %v808 = vsel %vm792, %v800, %v784
  %v809 = vadd.f32 %v801, 1.0
  %v810 = vadd.f32 %v802, 1.0
  %v811 = vadd.f32 %v803, 1.0
  %v812 = vadd.f32 %v804, 1.0
  %v813 = vadd.f32 %v805, 1.0
  %v814 = vadd.f32 %v806, 1.0
  %v815 = vadd.f32 %v807, 1.0
  %v816 = vadd.f32 %v808, 1.0
  %v817 = vmul.f32 %v505, %v809
  %v818 = vmul.f32 %v506, %v810
  %v819 = vmul.f32 %v507, %v811
  %v820 = vmul.f32 %v508, %v812
  %v821 = vmul.f32 %v509, %v813
  %v822 = vmul.f32 %v510, %v814
  %v823 = vmul.f32 %v511, %v815
  %v824 = vmul.f32 %v512, %v816
  %v825 = vld [vmem:[%s6] sm:$0xff]
  %v826 = vld [vmem:[%s6 + $0x8] sm:$0xff]
  %v827 = vld [vmem:[%s6 + $0x10] sm:$0xff]
  %v828 = vld [vmem:[%s6 + $0x18] sm:$0xff]
  %v830 = vsel %vm431, %v825, 0
  %v833 = vsel %vm431, %v826, 0
  %v836 = vsel %vm431, %v827, 0
  %v839 = vsel %vm431, %v828, 0
  %841 = vmatpush.msra.mxu0 0.0
  %842 = vmatpush.msra.mxu0 0.0
  %843 = vmatpush.msra.mxu0 0.0
  %844 = vmatpush.msra.mxu0 0.0
  %845 = vmatpush.msra.mxu0 0.0
  %846 = vmatpush.msra.mxu0 0.0
  %847 = vmatpush.msra.mxu0 0.0
  %848 = vmatpush.msra.mxu0 0.0
  %849 = vmatpush.msra.mxu0 %v824
  %850 = vmatpush.msra.mxu0 %v823
  %851 = vmatpush.msra.mxu0 %v822
  %852 = vmatpush.msra.mxu0 %v821
  %853 = vmatpush.msra.mxu0 %v820
  %854 = vmatpush.msra.mxu0 %v819
  %855 = vmatpush.msra.mxu0 %v818
  %856 = vmatpush.msra.mxu0 %v817
  %857 = vmatmul.f32.gmra.mxu0 %v830
  %v858 = vpop.f32.mrf.mxu0
  %v859 = vadd.f32 0.0, %v858
  %860 = vmatmul.f32.gmra.mxu0 %v833
  %v861 = vpop.f32.mrf.mxu0
  %v862 = vadd.f32 0.0, %v861
  %863 = vmatmul.f32.gmra.mxu0 %v836
  %v864 = vpop.f32.mrf.mxu0
  %v865 = vadd.f32 0.0, %v864
  %866 = vmatmul.f32.gmra.mxu0 %v839
  %v867 = vpop.f32.mrf.mxu0
  %v868 = vadd.f32 0.0, %v867
  %869 = vdwg.mxu0
  %v870 = vadd.f32 %v58, %v859
  %v871 = vadd.f32 %v59, %v862
  %v872 = vadd.f32 %v60, %v865
  %v873 = vadd.f32 %v61, %v868
  %874 = vset.pattern.permute.xlu0 3
  %875 = vperm.xlu0 %874, %v74
  %v876 = vpop.permute.xlu0 %875
  %878 = vset.pattern.permute.xlu0 3
  %879 = vperm.xlu0 %878, %v75
  %v880 = vpop.permute.xlu0 %879
  %882 = vset.pattern.permute.xlu0 3
  %883 = vperm.xlu0 %882, %v76
  %v884 = vpop.permute.xlu0 %883
  %886 = vset.pattern.permute.xlu0 3
  %887 = vperm.xlu0 %886, %v77
  %v888 = vpop.permute.xlu0 %887
  %v890 = vadd.f32 %v870, %v876
  %v891 = vadd.f32 %v871, %v880
  %v892 = vadd.f32 %v872, %v884
  %v893 = vadd.f32 %v873, %v888
  %894 = vxpose.xlu0.b32.start [1/16] %v890, 128
  %895 = vxpose.xlu0.b32.cont [2/16] %v891, 128
  %896 = vxpose.xlu0.b32.cont [3/16] %v892, 128
  %897 = vxpose.xlu0.b32.cont [4/16] %v893, 128
  %898 = vxpose.xlu0.b32.cont [5/16] 0.0, 128
  %899 = vxpose.xlu0.b32.cont [6/16] 0.0, 128
  %900 = vxpose.xlu0.b32.cont [7/16] 0.0, 128
  %901 = vxpose.xlu0.b32.cont [8/16] 0.0, 128
  %902 = vxpose.xlu0.b32.cont [9/16] 0.0, 128
  %903 = vxpose.xlu0.b32.cont [10/16] 0.0, 128
  %904 = vxpose.xlu0.b32.cont [11/16] 0.0, 128
  %905 = vxpose.xlu0.b32.cont [12/16] 0.0, 128
  %906 = vxpose.xlu0.b32.cont [13/16] 0.0, 128
  %907 = vxpose.xlu0.b32.cont [14/16] 0.0, 128
  %908 = vxpose.xlu0.b32.cont [15/16] 0.0, 128
  %909 = vxpose.xlu0.b32.end [16/16] 0.0, 128
  %v910 = vpop.trf.xlu0
  %v911 = vpop.trf.xlu0
  %v912 = vpop.trf.xlu0
  %v913 = vpop.trf.xlu0
  %v914 = vpop.trf.xlu0
  %v915 = vpop.trf.xlu0
  %v916 = vpop.trf.xlu0
  %v917 = vpop.trf.xlu0
  %v918 = vpop.trf.xlu0
  %v919 = vpop.trf.xlu0
  %v920 = vpop.trf.xlu0
  %v921 = vpop.trf.xlu0
  %v922 = vpop.trf.xlu0
  %v923 = vpop.trf.xlu0
  %v924 = vpop.trf.xlu0
  %v925 = vpop.trf.xlu0
  %926 = vst.msk [vmem:[%s7] sm:$0xff] %vm259, %v910
  %927 = vst.msk [vmem:[%s7 + $0x8] sm:$0xff] %vm259, %v911
  %928 = vst.msk [vmem:[%s7 + $0x10] sm:$0xff] %vm259, %v912
  %929 = vst.msk [vmem:[%s7 + $0x18] sm:$0xff] %vm259, %v913
  %930 = vst.msk [vmem:[%s7 + $0x20] sm:$0xff] %vm259, %v914
  %931 = vst.msk [vmem:[%s7 + $0x28] sm:$0xff] %vm259, %v915
  %932 = vst.msk [vmem:[%s7 + $0x30] sm:$0xff] %vm259, %v916
  %933 = vst.msk [vmem:[%s7 + $0x38] sm:$0xff] %vm259, %v917
  %934 = vst.msk [vmem:[%s7 + $0x40] sm:$0xff] %vm259, %v918
  %935 = vst.msk [vmem:[%s7 + $0x48] sm:$0xff] %vm259, %v919
  %936 = vst.msk [vmem:[%s7 + $0x50] sm:$0xff] %vm259, %v920
  %937 = vst.msk [vmem:[%s7 + $0x58] sm:$0xff] %vm259, %v921
  %938 = vst.msk [vmem:[%s7 + $0x60] sm:$0xff] %vm259, %v922
  %939 = vst.msk [vmem:[%s7 + $0x68] sm:$0xff] %vm259, %v923
  %940 = vst.msk [vmem:[%s7 + $0x70] sm:$0xff] %vm259, %v924
  %941 = vst.msk [vmem:[%s7 + $0x78] sm:$0xff] %vm259, %v925
  // Predicated region
  $region30: #{mona_forward.1} parent=0 // pred_check
    _
  $region31: #{mona_forward.1} parent=0 // pred_check_branch
    %943 = sbr.rel (0) target = $region33
  $region32: #{mona_forward.1} parent=0 // pred_region
    _
  $region33: #{mona_forward.1} parent=0 // pred_fallthru
    _
  // Predicated region
  $region34: #{mona_forward.1} parent=0 // pred_check
    _
  $region35: #{mona_forward.1} parent=0 // pred_check_branch
    %945 = sbr.rel (0) target = $region37
  $region36: #{mona_forward.1} parent=0 // pred_region
    _
  $region37: #{mona_forward.1} parent=0 // pred_fallthru
    _

</llo_original>
